<compile_context>
chip_gen: v7x
topology: tpu7x:2x2x1
jax: 0.10.0
libtpu: 0.0.40
codegen_flags: <defaults>
</compile_context>

<pallas_src>
import functools

import jax
import jax.numpy as jnp
from jax.experimental import pallas as pl
from jax.experimental.pallas import tpu as pltpu

BN_EPS = 1e-5


def _round_up(v, m):
    return ((v + m - 1) // m) * m


# --------------------------------------------------------------------------
# Kernel: fused SepConv1d block (eval) for a tile of `bt` batch rows
# --------------------------------------------------------------------------
def _sepconv1d_kernel(x_ref, w_ref, o_ref, p_ref, *, cin, ksize, stride, n_out):
    """x_ref : (bt, stride*cin, l_stream)  de-interleaved, zero-padded streams;
               row r*cin + c holds x_pad[c, stride*j + r] at lane j.
       w_ref : (cout, ksize*cin + 1)       fused weights, last column = bias.
       o_ref : (bt, cout, n_out)           ReLU(BN(pointwise(depthwise(x)))).
       p_ref : (bt, ksize*cin + 1, n_out)  VMEM scratch: im2col panel + ones row.
    """
    bt = x_ref.shape[0]
    kc = cin * ksize

    # Ones row drives the fused bias out of the same matmul.
    p_ref[:, kc:kc + 1, :] = jnp.ones((bt, 1, n_out), jnp.float32)

    # im2col: tap k (= stride*q + r) is a static contiguous slice of stream r.
    for k in range(ksize):
        r, q = k % stride, k // stride
        p_ref[:, k * cin:(k + 1) * cin, :] = \
            x_ref[:, r * cin:(r + 1) * cin, q:q + n_out]

    # One fused (Cout, K*Cin+1) x (K*Cin+1, Nout) matmul per batch row.
    w = w_ref[...]
    for b in range(bt):
        z = jnp.dot(w, p_ref[b], preferred_element_type=jnp.float32)
        o_ref[b] = jnp.maximum(z, 0.0).astype(o_ref.dtype)


# --------------------------------------------------------------------------
# Wrapper
# --------------------------------------------------------------------------
def _fold_params(params):
    """Fold depthwise conv, pointwise conv and eval-mode BatchNorm into one
    augmented weight matrix (Cout, K*Cin + 1); last column is the fused bias."""
    dw_w, dw_b = params["dw_w"], params["dw_b"]              # (Cin,K), (Cin,1)
    pw_w, pw_b = params["pw_w"], params["pw_b"]              # (Cout,Cin), (Cout,1)
    scale, shift = params["bn_scale"], params["bn_shift"]    # (Cout,1) each
    cout, cin = pw_w.shape
    k = dw_w.shape[1]
    # w_eff[o, k*cin + c] = scale[o] * pw_w[o, c] * dw_w[c, k]
    w_eff = (pw_w[:, None, :] * dw_w.T[None, :, :]) * scale[:, :, None]
    w_eff = w_eff.reshape(cout, k * cin)
    b_eff = scale * (pw_b + pw_w @ dw_b) + shift              # (Cout, 1)
    return jnp.concatenate([w_eff, b_eff], axis=1)            # (Cout, K*Cin+1)


def sepconv1d_forward(x, params, *, ksize, stride, pad):
    """x: (B, Cin, L) -> (B, Cout, Lout), eval-mode SepConv1d forward."""
    B, cin, L = x.shape
    cout = params["pw_w"].shape[0]
    l_out = (L + 2 * pad - ksize) // stride + 1
    assert l_out > 0
    n_out = _round_up(l_out, 128)                     # lane-dense output block
    max_q = (ksize - 1) // stride
    l_stream = max(max_q + n_out, -(-(L + pad) // stride))
    lp = stride * l_stream

    # Zero-pad and de-interleave into `stride` phase streams so every conv tap
    # is a static contiguous lane slice inside the kernel.
    x_p = jnp.pad(x, ((0, 0), (0, 0), (pad, lp - L - pad)))
    x_d = (x_p.reshape(B, cin, l_stream, stride)
               .transpose(0, 3, 1, 2)
               .reshape(B, stride * cin, l_stream))

    # Batch tile: aim for >=4 grid steps when B allows (pipelining + megacore),
    # capped so per-step VMEM stays small on every generation (v7x: 64 MiB).
    bt = max(1, min(32, pl.cdiv(B, 4)))
    bp = pl.cdiv(B, bt) * bt
    if bp != B:
        x_d = jnp.pad(x_d, ((0, bp - B), (0, 0), (0, 0)))

    w_aug = _fold_params(params)                      # single small operand

    kern = functools.partial(_sepconv1d_kernel, cin=cin, ksize=ksize,
                             stride=stride, n_out=n_out)
    out = pl.pallas_call(
        kern,
        out_shape=jax.ShapeDtypeStruct((bp, cout, n_out), jnp.float32),
        grid=(bp // bt,),
        in_specs=[
            pl.BlockSpec((bt, stride * cin, l_stream), lambda g: (g, 0, 0)),
            pl.BlockSpec((cout, ksize * cin + 1), lambda g: (0, 0)),
        ],
        out_specs=pl.BlockSpec((bt, cout, n_out), lambda g: (g, 0, 0)),
        scratch_shapes=[pltpu.VMEM((bt, ksize * cin + 1, n_out), jnp.float32)],
        compiler_params=pltpu.CompilerParams(
            dimension_semantics=("parallel",)),       # v7x: batch over both TCs
    )(x_d, w_aug)
    return out[:B, :, :l_out]


# --------------------------------------------------------------------------
# Pure-JAX reference (eval-mode SepConv1d) and parameter init
# --------------------------------------------------------------------------
def sepconv1d_reference(x, params, *, ksize, stride, pad):
    xp = jnp.pad(x, ((0, 0), (0, 0), (pad, pad)))
    l_out = (x.shape[-1] + 2 * pad - ksize) // stride + 1
    taps = [xp[:, :, k:k + stride * (l_out - 1) + 1:stride] for k in range(ksize)]
    dw = sum(t * params["dw_w"][None, :, k:k + 1] for k, t in enumerate(taps))
    dw = dw + params["dw_b"][None]
    pw = jnp.einsum("oc,bcl->bol", params["pw_w"], dw,
                    precision=jax.lax.Precision.HIGHEST) + params["pw_b"][None]
    z = pw * params["bn_scale"][None] + params["bn_shift"][None]
    return jnp.maximum(z, 0.0)


def _uniform(key, shape, bound):
    return jax.random.uniform(key, shape, jnp.float32, -bound, bound)


def init_sepconv_params(key, ni, no, ksize, batch_norm=True):
    k1, k2, k3, k4, k5, k6, k7, k8 = jax.random.split(key, 8)
    dw_bound = 1.0 / (ksize ** 0.5)       # depthwise fan_in = (ni/groups)*K = K
    pw_bound = 1.0 / (ni ** 0.5)          # pointwise fan_in = ni
    if batch_norm:
        gamma = jax.random.uniform(k5, (no,), jnp.float32, 0.5, 1.5)
        beta = _uniform(k6, (no,), 0.1)
        mean = _uniform(k7, (no,), 0.1)
        var = jax.random.uniform(k8, (no,), jnp.float32, 0.5, 1.5)
        scale = gamma / jnp.sqrt(var + BN_EPS)
        shift = beta - mean * scale
    else:
        scale = jnp.ones((no,), jnp.float32)
        shift = jnp.zeros((no,), jnp.float32)
    return dict(
        dw_w=_uniform(k1, (ni, ksize), dw_bound),
        dw_b=_uniform(k2, (ni, 1), dw_bound),
        pw_w=_uniform(k3, (no, ni), pw_bound),
        pw_b=_uniform(k4, (no, 1), pw_bound),
        bn_scale=scale.reshape(no, 1),
        bn_shift=shift.reshape(no, 1),
    )


# --------------------------------------------------------------------------
if __name__ == "__main__":
    # SepConv1d(ni=4, no=32, kernel=8, stride=2, pad=3, drop=0.5, batch_norm=True)
    B, ni, no = 2, 4, 32
    ksize, stride, pad = 8, 2, 3
    L = 256                                   # -> Lout = 128 (lane-dense output)

    key = jax.random.PRNGKey(0)
    key, xk, pk = jax.random.split(key, 3)
    x = jax.random.normal(xk, (B, ni, L), jnp.float32)
    params = init_sepconv_params(pk, ni, no, ksize, batch_norm=True)

    out = jax.block_until_ready(
        sepconv1d_forward(x, params, ksize=ksize, stride=stride, pad=pad))

    l_out = (L + 2 * pad - ksize) // stride + 1
    assert out.shape == (B, no, l_out), out.shape
    assert bool(jnp.all(jnp.isfinite(out)))

    ref = sepconv1d_reference(x, params, ksize=ksize, stride=stride, pad=pad)
    max_err = float(jnp.max(jnp.abs(out - ref)))
    assert max_err < 1e-3, max_err

    print("KERNEL_OK")
</pallas_src>

<mosaic_0001>
module attributes {stable_mosaic.version = 11 : i64} {
  func.func @_sepconv1d_kernel(%arg0: i32, %arg1: memref<1x8x131xf32, #tpu.memory_space<vmem>>, %arg2: memref<32x33xf32, #tpu.memory_space<vmem>>, %arg3: memref<1x32x128xf32, #tpu.memory_space<vmem>>, %arg4: memref<1x33x128xf32, #tpu.memory_space<vmem>>) attributes {dimension_semantics = [#tpu.dimension_semantics<parallel>], iteration_bounds = array<i64: 2>, scalar_prefetch = 0 : i64, scratch_operands = 1 : i64, tpu.core_type = #tpu.core_type<tc>, window_params = [{transform_indices = @transform_0, window_bounds = array<i64: 1, 8, 131>}, {pipeline_mode = #tpu.pipeline_mode<synchronous>, transform_indices = @transform_1, window_bounds = array<i64: 32, 33>}, {transform_indices = @transform_2, window_bounds = array<i64: 1, 32, 128>}]} {
    %cst = arith.constant 1.000000e+00 : f32
    %0 = vector.broadcast %cst : f32 to vector<1x1x128xf32>
    %c0 = arith.constant 0 : index
    %c32 = arith.constant 32 : index
    %c0_0 = arith.constant 0 : index
    %1 = vector.load %arg4[%c0, %c32, %c0_0] : memref<1x33x128xf32, #tpu.memory_space<vmem>>, vector<1x1x128xf32>
    tpu.vector_store %arg4[%c0, %c32, %c0_0], %0 {strides = array<i32>} : memref<1x33x128xf32, #tpu.memory_space<vmem>>, vector<1x1x128xf32>,
    %c0_1 = arith.constant 0 : index
    %c0_2 = arith.constant 0 : index
    %c0_3 = arith.constant 0 : index
    %2 = vector.load %arg1[%c0_1, %c0_2, %c0_3] : memref<1x8x131xf32, #tpu.memory_space<vmem>>, vector<1x4x128xf32>
    %c0_4 = arith.constant 0 : index
    %c0_5 = arith.constant 0 : index
    %c0_6 = arith.constant 0 : index
    %3 = vector.load %arg4[%c0_4, %c0_5, %c0_6] : memref<1x33x128xf32, #tpu.memory_space<vmem>>, vector<1x4x128xf32>
    tpu.vector_store %arg4[%c0_4, %c0_5, %c0_6], %2 {strides = array<i32>} : memref<1x33x128xf32, #tpu.memory_space<vmem>>, vector<1x4x128xf32>,
    %c0_7 = arith.constant 0 : index
    %c4 = arith.constant 4 : index
    %c0_8 = arith.constant 0 : index
    %4 = vector.load %arg1[%c0_7, %c4, %c0_8] : memref<1x8x131xf32, #tpu.memory_space<vmem>>, vector<1x4x128xf32>
    %c0_9 = arith.constant 0 : index
    %c4_10 = arith.constant 4 : index
    %c0_11 = arith.constant 0 : index
    %5 = vector.load %arg4[%c0_9, %c4_10, %c0_11] : memref<1x33x128xf32, #tpu.memory_space<vmem>>, vector<1x4x128xf32>
    tpu.vector_store %arg4[%c0_9, %c4_10, %c0_11], %4 {strides = array<i32>} : memref<1x33x128xf32, #tpu.memory_space<vmem>>, vector<1x4x128xf32>,
    %c0_12 = arith.constant 0 : index
    %c0_13 = arith.constant 0 : index
    %c1 = arith.constant 1 : index
    %6 = vector.load %arg1[%c0_12, %c0_13, %c1] : memref<1x8x131xf32, #tpu.memory_space<vmem>>, vector<1x4x128xf32>
    %c0_14 = arith.constant 0 : index
    %c8 = arith.constant 8 : index
    %c0_15 = arith.constant 0 : index
    %7 = vector.load %arg4[%c0_14, %c8, %c0_15] : memref<1x33x128xf32, #tpu.memory_space<vmem>>, vector<1x4x128xf32>
    tpu.vector_store %arg4[%c0_14, %c8, %c0_15], %6 {strides = array<i32>} : memref<1x33x128xf32, #tpu.memory_space<vmem>>, vector<1x4x128xf32>,
    %c0_16 = arith.constant 0 : index
    %c4_17 = arith.constant 4 : index
    %c1_18 = arith.constant 1 : index
    %8 = vector.load %arg1[%c0_16, %c4_17, %c1_18] : memref<1x8x131xf32, #tpu.memory_space<vmem>>, vector<1x4x128xf32>
    %c0_19 = arith.constant 0 : index
    %c12 = arith.constant 12 : index
    %c0_20 = arith.constant 0 : index
    %9 = vector.load %arg4[%c0_19, %c12, %c0_20] : memref<1x33x128xf32, #tpu.memory_space<vmem>>, vector<1x4x128xf32>
    tpu.vector_store %arg4[%c0_19, %c12, %c0_20], %8 {strides = array<i32>} : memref<1x33x128xf32, #tpu.memory_space<vmem>>, vector<1x4x128xf32>,
    %c0_21 = arith.constant 0 : index
    %c0_22 = arith.constant 0 : index
    %c2 = arith.constant 2 : index
    %10 = vector.load %arg1[%c0_21, %c0_22, %c2] : memref<1x8x131xf32, #tpu.memory_space<vmem>>, vector<1x4x128xf32>
    %c0_23 = arith.constant 0 : index
    %c16 = arith.constant 16 : index
    %c0_24 = arith.constant 0 : index
    %11 = vector.load %arg4[%c0_23, %c16, %c0_24] : memref<1x33x128xf32, #tpu.memory_space<vmem>>, vector<1x4x128xf32>
    tpu.vector_store %arg4[%c0_23, %c16, %c0_24], %10 {strides = array<i32>} : memref<1x33x128xf32, #tpu.memory_space<vmem>>, vector<1x4x128xf32>,
    %c0_25 = arith.constant 0 : index
    %c4_26 = arith.constant 4 : index
    %c2_27 = arith.constant 2 : index
    %12 = vector.load %arg1[%c0_25, %c4_26, %c2_27] : memref<1x8x131xf32, #tpu.memory_space<vmem>>, vector<1x4x128xf32>
    %c0_28 = arith.constant 0 : index
    %c20 = arith.constant 20 : index
    %c0_29 = arith.constant 0 : index
    %13 = vector.load %arg4[%c0_28, %c20, %c0_29] : memref<1x33x128xf32, #tpu.memory_space<vmem>>, vector<1x4x128xf32>
    tpu.vector_store %arg4[%c0_28, %c20, %c0_29], %12 {strides = array<i32>} : memref<1x33x128xf32, #tpu.memory_space<vmem>>, vector<1x4x128xf32>,
    %c0_30 = arith.constant 0 : index
    %c0_31 = arith.constant 0 : index
    %c3 = arith.constant 3 : index
    %14 = vector.load %arg1[%c0_30, %c0_31, %c3] : memref<1x8x131xf32, #tpu.memory_space<vmem>>, vector<1x4x128xf32>
    %c0_32 = arith.constant 0 : index
    %c24 = arith.constant 24 : index
    %c0_33 = arith.constant 0 : index
    %15 = vector.load %arg4[%c0_32, %c24, %c0_33] : memref<1x33x128xf32, #tpu.memory_space<vmem>>, vector<1x4x128xf32>
    tpu.vector_store %arg4[%c0_32, %c24, %c0_33], %14 {strides = array<i32>} : memref<1x33x128xf32, #tpu.memory_space<vmem>>, vector<1x4x128xf32>,
    %c0_34 = arith.constant 0 : index
    %c4_35 = arith.constant 4 : index
    %c3_36 = arith.constant 3 : index
    %16 = vector.load %arg1[%c0_34, %c4_35, %c3_36] : memref<1x8x131xf32, #tpu.memory_space<vmem>>, vector<1x4x128xf32>
    %c0_37 = arith.constant 0 : index
    %c28 = arith.constant 28 : index
    %c0_38 = arith.constant 0 : index
    %17 = vector.load %arg4[%c0_37, %c28, %c0_38] : memref<1x33x128xf32, #tpu.memory_space<vmem>>, vector<1x4x128xf32>
    tpu.vector_store %arg4[%c0_37, %c28, %c0_38], %16 {strides = array<i32>} : memref<1x33x128xf32, #tpu.memory_space<vmem>>, vector<1x4x128xf32>,
    %c0_39 = arith.constant 0 : index
    %c0_40 = arith.constant 0 : index
    %18 = vector.load %arg2[%c0_39, %c0_40] : memref<32x33xf32, #tpu.memory_space<vmem>>, vector<32x33xf32>
    %c0_41 = arith.constant 0 : index
    %c0_42 = arith.constant 0 : index
    %c0_43 = arith.constant 0 : index
    %19 = vector.load %arg4[%c0_41, %c0_42, %c0_43] : memref<1x33x128xf32, #tpu.memory_space<vmem>>, vector<1x33x128xf32>
    %20 = vector.shape_cast %19 : vector<1x33x128xf32> to vector<33x128xf32>
    %cst_44 = arith.constant dense<0.000000e+00> : vector<32x128xf32>
    %21 = tpu.matmul %18, %20, %cst_44 {dimension_numbers = #tpu.dot_dimension_numbers<[1], [0], [0], [1], [0, 0, 1, 1], [], []>} : vector<32x33xf32>, vector<33x128xf32>, vector<32x128xf32> -> vector<32x128xf32>
    %cst_45 = arith.constant 0.000000e+00 : f32
    %22 = vector.broadcast %cst_45 : f32 to vector<32x128xf32>
    %23 = arith.maximumf %21, %22 : vector<32x128xf32>
    %c0_46 = arith.constant 0 : index
    %c0_47 = arith.constant 0 : index
    %c0_48 = arith.constant 0 : index
    %24 = vector.load %arg3[%c0_46, %c0_47, %c0_48] : memref<1x32x128xf32, #tpu.memory_space<vmem>>, vector<1x32x128xf32>
    %25 = vector.shape_cast %24 : vector<1x32x128xf32> to vector<32x128xf32>
    %26 = vector.shape_cast %23 : vector<32x128xf32> to vector<1x32x128xf32>
    tpu.vector_store %arg3[%c0_46, %c0_47, %c0_48], %26 {strides = array<i32>} : memref<1x32x128xf32, #tpu.memory_space<vmem>>, vector<1x32x128xf32>,
    return
  }
  func.func @transform_0(%arg0: i32) -> (i32, i32, i32) {
    %c0_i32 = arith.constant 0 : i32
    %c0_i32_0 = arith.constant 0 : i32
    %c0_i32_1 = arith.constant 0 : i32
    return %arg0, %c0_i32, %c0_i32_0 : i32, i32, i32
  }
  func.func @transform_1(%arg0: i32) -> (i32, i32) {
    %c0_i32 = arith.constant 0 : i32
    %c0_i32_0 = arith.constant 0 : i32
    %c0_i32_1 = arith.constant 0 : i32
    return %c0_i32, %c0_i32_0 : i32, i32
  }
  func.func @transform_2(%arg0: i32) -> (i32, i32, i32) {
    %c0_i32 = arith.constant 0 : i32
    %c0_i32_0 = arith.constant 0 : i32
    %c0_i32_1 = arith.constant 0 : i32
    return %arg0, %c0_i32, %c0_i32_0 : i32, i32, i32
  }
}

</mosaic_0001>

<llo_original>
// kernel: tpu_custom_call.1
$region0: #{tpu_custom_call.1}
  #allocation0 [shape = 'u32[]', space=smem, size = 0x4, offset = 0x4, fixed_abs, tag = 'smem constant byte address 0x4 - core index']
  #allocation1 [shape = 'u32[144,128]{1,0:T(1,128)}', space=vmem, size = 0x12000, scoped, tag = 'internal scratch']
  #allocation2 [shape = 'f32[1,33,128]{2,1,0:T(8,128)}', space=vmem, size = 0x5000, scoped, tag = 'scratch operand']
  %s0 = inlined_call_operand.hbm [shape: f32[2,8,131], index: 0, kind: input, shape index: {}]
  %s1 = inlined_call_operand.hbm [shape: f32[32,33], index: 1, kind: input, shape index: {}]
  %s2 = inlined_call_operand.hbm [shape: f32[2,32,128], index: 2, kind: output, shape index: {}]
  %s3 = sld [smem:[#allocation0]]
  $region49: #{tpu_custom_call.1} parent=0
    _
  %s5 = ssub.s32 1, %s3
  %s6 = scalar_select 0, %s5, %s3
  $region1: #{tpu_custom_call.1} parent=0
    #allocation3 [shape = 'u8[16384]{0}', space=vmem, size = 0x4000, scoped, tag = 'input window, operand 0']
    #allocation4 [shape = 's32[2]{0}', space=sflag, size = 0x8, scoped, tag = 'scoped memory for tpu_custom_call.1']
    #allocation5 [shape = 's32[2]{0}', space=sflag, size = 0x8, scoped, tag = 'scoped memory for tpu_custom_call.1']
    #allocation6 [shape = 'u8[16384]{0}', space=vmem, size = 0x4000, scoped, tag = 'input window, operand 1, single buffered']
    #allocation7 [shape = 's32[1]{0}', space=sflag, size = 0x4, scoped, tag = 'scoped memory for tpu_custom_call.1']
    #allocation8 [shape = 'u8[32768]{0}', space=vmem, size = 0x8000, scoped, tag = 'output window, operand 0']
    %7 = vsyncpa [#allocation4], 0
    %s8 = scalar_lea.sflag [#allocation4], 1
    %9 = vsyncpa %s8, 0
    %10 = vsyncpa [#allocation7], 0
    %11 = vsyncpa [#allocation5], 0
    %s12 = scalar_lea.sflag [#allocation5], 1
    %13 = vsyncpa %s12, 0
    loop: start=0, step=1, limit=4
    $region2: #{tpu_custom_call.1} parent=1 // loop_pre_header
      _
    $region3: #{tpu_custom_call.1} parent=1 // loop_header
      %s15 = sphi 0, %s19
      %p16 = scmp.ge.s32.totalorder %s15, 4
      %s25 = sphi 0, %s27
      %s28 = sphi 0, %s25
      %s29 = sphi 0, %s28
      %s45 = sphi 0, %s29
      %s49 = sphi 0, %s49
      %s51 = sphi 0, %s49
      %s52 = sphi 0, %s51
      %s66 = sphi 0, %s52
      %s72 = sphi 0, %s74
      %s75 = sphi 0, %s72
      %s76 = sphi 0, %s75
      %s92 = sphi 0, %s76
    $region4: #{tpu_custom_call.1} parent=1 // loop_header_branch
      %18 = sbr.rel (%p16) target = $region8
    $region5: #{tpu_custom_call.1} parent=1 // loop_body
      %s20 = ssub.s32 %s15, 1
      %s21 = ssub.s32 %s15, 2
      %s22 = sadd.s32 %s15, 1
      %s23 = ssub.s32 %s15, %s22
      %p24 = scmp.eq.s32.totalorder %s23, 0
      %s26 = sadd.s32 %s25, 1
      %s27 = scalar_select %p24, %s25, %s26
      %p30 = pneg %p24
      %p31 = scmp.eq.s32.totalorder %s15, 1
      %p32 = por %p30, %p31
      %p33 = scmp.ne.s32.totalorder %s25, %s28
      %p34 = scmp.eq.s32.totalorder %s15, 0
      %p35 = por %p33, %p34
      %p36 = scmp.ne.s32.totalorder %s25, %s28
      %p37 = scmp.eq.s32.totalorder %s20, 1
      %p38 = por %p36, %p37
      %p39 = scmp.ne.s32.totalorder %s28, %s29
      %p40 = scmp.eq.s32.totalorder %s20, 0
      %p41 = por %p39, %p40
      %p42 = scmp.ne.s32.totalorder %s28, %s29
      %p43 = scmp.eq.s32.totalorder %s21, 1
      %p44 = por %p42, %p43
      %p46 = scmp.ne.s32.totalorder %s29, %s45
      %p47 = scmp.eq.s32.totalorder %s21, 0
      %p48 = por %p46, %p47
      %s50 = sadd.s32 %s49, 1
      %p53 = scmp.eq.s32.totalorder %s15, 1
      %p54 = scmp.ne.s32.totalorder %s49, %s51
      %p55 = scmp.eq.s32.totalorder %s15, 0
      %p56 = por %p54, %p55
      %p57 = scmp.ne.s32.totalorder %s49, %s51
      %p58 = scmp.eq.s32.totalorder %s20, 1
      %p59 = por %p57, %p58
      %p60 = scmp.ne.s32.totalorder %s51, %s52
      %p61 = scmp.eq.s32.totalorder %s20, 0
      %p62 = por %p60, %p61
      %p63 = scmp.ne.s32.totalorder %s51, %s52
      %p64 = scmp.eq.s32.totalorder %s21, 1
      %p65 = por %p63, %p64
      %p67 = scmp.ne.s32.totalorder %s52, %s66
      %p68 = scmp.eq.s32.totalorder %s21, 0
      %p69 = por %p67, %p68
      %s70 = ssub.s32 %s15, %s22
      %p71 = scmp.eq.s32.totalorder %s70, 0
      %s73 = sadd.s32 %s72, 1
      %s74 = scalar_select %p71, %s72, %s73
      %p77 = pneg %p71
      %p78 = scmp.eq.s32.totalorder %s15, 1
      %p79 = por %p77, %p78
      %p80 = scmp.ne.s32.totalorder %s72, %s75
      %p81 = scmp.eq.s32.totalorder %s15, 0
      %p82 = por %p80, %p81
      %p83 = scmp.ne.s32.totalorder %s72, %s75
      %p84 = scmp.eq.s32.totalorder %s20, 1
      %p85 = por %p83, %p84
      %p86 = scmp.ne.s32.totalorder %s75, %s76
      %p87 = scmp.eq.s32.totalorder %s20, 0
      %p88 = por %p86, %p87
      %p89 = scmp.ne.s32.totalorder %s75, %s76
      %p90 = scmp.eq.s32.totalorder %s21, 1
      %p91 = por %p89, %p90
      %p93 = scmp.ne.s32.totalorder %s76, %s92
      %p94 = scmp.eq.s32.totalorder %s21, 0
      %p95 = por %p93, %p94
      %p96 = scmp.le.s32.totalorder 1, %s15
      %p97 = scmp.lt.s32.totalorder %s15, 3
      %p98 = pnand %p96, %p97
      %p99 = pneg %p98
      // Predicated region
      $region9: #{tpu_custom_call.1} parent=5 // pred_check
        _
      $region10: #{tpu_custom_call.1} parent=5 // pred_check_branch
        %101 = sbr.rel (%p98) target = $region12
      $region11: #{tpu_custom_call.1} parent=5 // pred_region
        %s102 = ssub.s32 %s15, 1
        // Predicated region
        $region13: #{tpu_custom_call.1} parent=11 // pred_check
          %p103 = pneg %p62
        $region14: #{tpu_custom_call.1} parent=11 // pred_check_branch
          %105 = sbr.rel (%p103) target = $region16
        $region15: #{tpu_custom_call.1} parent=11 // pred_region
          %s107 = ssub.s32 512, 512
          %108 = vsyncadd [#allocation7], %s107
          %s109 = sshll.u32 [#allocation6], 4
          %s110 = int_to_ptr.vmem [resolvable:$true] %s109
          %115 = dma.hbm_to_vmem [thread:$0]  %s1, 512, %s110, [#allocation7], 128, 128, 8
        $region16: #{tpu_custom_call.1} parent=11 // pred_fallthru
          _
      $region12: #{tpu_custom_call.1} parent=5 // pred_fallthru
        _
      %p116 = scmp.lt.s32.totalorder %s15, 2
      // Predicated region
      $region17: #{tpu_custom_call.1} parent=5 // pred_check
        %p117 = pneg %p116
      $region18: #{tpu_custom_call.1} parent=5 // pred_check_branch
        %119 = sbr.rel (%p117) target = $region20
      $region19: #{tpu_custom_call.1} parent=5 // pred_region
        // Predicated region
        $region21: #{tpu_custom_call.1} parent=19 // pred_check
          %p120 = pneg %p35
        $region22: #{tpu_custom_call.1} parent=19 // pred_check_branch
          %122 = sbr.rel (%p120) target = $region24
        $region23: #{tpu_custom_call.1} parent=19 // pred_region
          %s123 = sand.u32 %s25, 1
          %s124 = scalar_lea.sflag [#allocation4], %s123
          %s125 = sand.u32 %s25, 1
          %s126 = smul.addr %s125, 16
          %s127 = scalar_lea.vmem [#allocation3], %s126
          %s129 = ssub.s32 256, 256
          %130 = vsyncadd %s124, %s129
          %s131 = smul.addr %s15, 2
          %s132 = smul.addr %s131, 128
          %s133 = scalar_lea.hbm %s0, %s132
          %s135 = sshll.u32 %s127, 4
          %s136 = int_to_ptr.vmem [resolvable:$true] %s135
          %138 = dma.hbm_to_vmem [thread:$0]  %s133, 256, %s136, %s124
        $region24: #{tpu_custom_call.1} parent=19 // pred_fallthru
          _
      $region20: #{tpu_custom_call.1} parent=5 // pred_fallthru
        _
      %p139 = scmp.le.s32.totalorder 1, %s15
      %p140 = scmp.lt.s32.totalorder %s15, 3
      %p141 = pnand %p139, %p140
      %p142 = pneg %p141
      // Predicated region
      $region25: #{tpu_custom_call.1} parent=5 // pred_check
        _
      $region26: #{tpu_custom_call.1} parent=5 // pred_check_branch
        %144 = sbr.rel (%p141) target = $region28
      $region27: #{tpu_custom_call.1} parent=5 // pred_region
        %s145 = ssub.s32 %s15, 1
        %s146 = sand.u32 %s28, 1
        %s147 = scalar_lea.sflag [#allocation4], %s146
        %s148 = sand.u32 %s28, 1
        %s149 = smul.addr %s148, 16
        %s150 = scalar_lea.vmem [#allocation3], %s149
        // Predicated region
        $region29: #{tpu_custom_call.1} parent=27 // pred_check
          %p151 = pneg %p41
        $region30: #{tpu_custom_call.1} parent=27 // pred_check_branch
          %153 = sbr.rel (%p151) target = $region32
        $region31: #{tpu_custom_call.1} parent=27 // pred_region
          %154 = dma.done %s147, 256
        $region32: #{tpu_custom_call.1} parent=27 // pred_fallthru
          _
        // Predicated region
        $region33: #{tpu_custom_call.1} parent=27 // pred_check
          %p155 = pneg %p62
        $region34: #{tpu_custom_call.1} parent=27 // pred_check_branch
          %157 = sbr.rel (%p155) target = $region36
        $region35: #{tpu_custom_call.1} parent=27 // pred_region
          %158 = dma.done [#allocation7], 512
        $region36: #{tpu_custom_call.1} parent=27 // pred_fallthru
          _
        %s159 = sand.u32 %s28, 1
        %s160 = scalar_lea.sflag [#allocation4], %s159
        %s161 = sand.u32 %s28, 1
        %s162 = smul.addr %s161, 16
        %s163 = scalar_lea.vmem [#allocation3], %s162
        %p164 = pneg %p41
        %p165 = pneg %p38
        %p166 = pneg %p62
        %p167 = pneg %p59
        %p168 = pneg %p88
        %p169 = pneg %p85
        %s170 = sand.u32 %s75, 1
        %s171 = scalar_lea.sflag [#allocation5], %s170
        %s172 = sand.u32 %s75, 1
        %s173 = smul.addr %s172, 32
        %s174 = scalar_lea.vmem [#allocation8], %s173
        %175 = vst [vmem:[#allocation2 + $0x20] sm:$0x1] 1.0
        %v176 = vld [vmem:[%s150] sm:$0xf]
        %177 = vst [vmem:[#allocation2] sm:$0xf] %v176
        %v178 = vld [vmem:[%s150] sm:$0xf0]
        %179 = vst [vmem:[#allocation2] sm:$0xf0] %v178
        %v180 = vld [vmem:[%s150] sm:$0xf]
        %v181 = vld [vmem:[%s150 + $0x8] sm:$0xf]
        %184 = vrot.lane.b32.xlu0 %v180, 127
        %v185 = vpop.permute.xlu0 %184
        %186 = vrot.lane.b32.xlu0 %v181, 127
        %v187 = vpop.permute.xlu0 %186
        %vm188 = vcmask 1039360
        %v189 = vsel %vm188, %v185, %v187
        %191 = vst [vmem:[#allocation2 + $0x8] sm:$0xf] %v189
        %v192 = vld [vmem:[%s150] sm:$0xf0]
        %v193 = vld [vmem:[%s150 + $0x8] sm:$0xf0]
        %196 = vrot.lane.b32.xlu0 %v192, 127
        %v197 = vpop.permute.xlu0 %196
        %198 = vrot.lane.b32.xlu0 %v193, 127
        %v199 = vpop.permute.xlu0 %198
        %v200 = vsel %vm188, %v197, %v199
        %202 = vst [vmem:[#allocation2 + $0x8] sm:$0xf0] %v200
        %v203 = vld [vmem:[%s150] sm:$0xf]
        %v204 = vld [vmem:[%s150 + $0x8] sm:$0xf]
        %207 = vrot.lane.b32.xlu0 %v203, 126
        %v208 = vpop.permute.xlu0 %207
        %209 = vrot.lane.b32.xlu0 %v204, 126
        %v210 = vpop.permute.xlu0 %209
        %vm211 = vcmask 1031168
        %v212 = vsel %vm211, %v208, %v210
        %214 = vst [vmem:[#allocation2 + $0x10] sm:$0xf] %v212
        %v215 = vld [vmem:[%s150] sm:$0xf0]
        %v216 = vld [vmem:[%s150 + $0x8] sm:$0xf0]
        %219 = vrot.lane.b32.xlu0 %v215, 126
        %v220 = vpop.permute.xlu0 %219
        %221 = vrot.lane.b32.xlu0 %v216, 126
        %v222 = vpop.permute.xlu0 %221
        %v223 = vsel %vm211, %v220, %v222
        %225 = vst [vmem:[#allocation2 + $0x10] sm:$0xf0] %v223
        %v226 = vld [vmem:[%s150] sm:$0xf]
        %v227 = vld [vmem:[%s150 + $0x8] sm:$0xf]
        %230 = vrot.lane.b32.xlu0 %v226, 125
        %v231 = vpop.permute.xlu0 %230
        %232 = vrot.lane.b32.xlu0 %v227, 125
        %v233 = vpop.permute.xlu0 %232
        %vm234 = vcmask 1022976
        %v235 = vsel %vm234, %v231, %v233
        %237 = vst [vmem:[#allocation2 + $0x18] sm:$0xf] %v235
        %v238 = vld [vmem:[%s150] sm:$0xf0]
        %v239 = vld [vmem:[%s150 + $0x8] sm:$0xf0]
        %242 = vrot.lane.b32.xlu0 %v238, 125
        %v243 = vpop.permute.xlu0 %242
        %244 = vrot.lane.b32.xlu0 %v239, 125
        %v245 = vpop.permute.xlu0 %244
        %v246 = vsel %vm234, %v243, %v245
        %248 = vst [vmem:[#allocation2 + $0x18] sm:$0xf0] %v246
        %v249 = vld [vmem:[#allocation6] sm:$0xff]
        %v250 = vld [vmem:[#allocation6 + $0x8] sm:$0xff]
        %v251 = vld [vmem:[#allocation6 + $0x10] sm:$0xff]
        %v252 = vld [vmem:[#allocation6 + $0x18] sm:$0xff]
        %v253 = vld [vmem:[#allocation2] sm:$0xff]
        %v254 = vld [vmem:[#allocation2 + $0x8] sm:$0xff]
        %v255 = vld [vmem:[#allocation2 + $0x10] sm:$0xff]
        %v256 = vld [vmem:[#allocation2 + $0x18] sm:$0xff]
        %v257 = vld [vmem:[#allocation2 + $0x20] sm:$0x1]
        %vm258 = vcmask 269312
        %v260 = vsel %vm258, %v249, 0
        %v263 = vsel %vm258, %v250, 0
        %v266 = vsel %vm258, %v251, 0
        %v269 = vsel %vm258, %v252, 0
        %vm271 = vcmask 1040384
        %v273 = vsel %vm271, %v257, 0
        %275 = vmatprep.subr.mxu0 0.0
        %276 = vmatpush1.msra.mxu0 %v253
        %277 = vmatprep.subr.mxu0 0.0
        %278 = vmatpush1.msra.mxu0 %v254
        %279 = vmatprep.subr.mxu0 0.0
        %280 = vmatpush1.msra.mxu0 %v255
        %281 = vmatprep.subr.mxu0 0.0
        %282 = vmatpush1.msra.mxu0 %v256
        %283 = vmatprep.subr.mxu0 0.0
        %284 = vmatpush1.msra.mxu0 %v273
        %285 = vmatprep.subr.mxu0 0.0
        %286 = vmatpush1.msra.mxu0 0.0
        %287 = vmatprep.subr.mxu0 0.0
        %288 = vmatpush1.msra.mxu0 0.0
        %289 = vmatprep.subr.mxu0 0.0
        %290 = vmatpush1.msra.mxu0 0.0
        %291 = vmatprep.subr.mxu0 0.0
        %292 = vmatpush1.msra.mxu0 0.0
        %293 = vmatprep.subr.mxu0 0.0
        %294 = vmatpush1.msra.mxu0 0.0
        %295 = vmatprep.subr.mxu0 0.0
        %296 = vmatpush1.msra.mxu0 0.0
        %297 = vmatprep.subr.mxu0 0.0
        %298 = vmatpush1.msra.mxu0 0.0
        %299 = vmatprep.subr.mxu0 0.0
        %300 = vmatpush1.msra.mxu0 0.0
        %301 = vmatprep.subr.mxu0 0.0
        %302 = vmatpush1.msra.mxu0 0.0
        %303 = vmatprep.subr.mxu0 0.0
        %304 = vmatpush1.msra.mxu0 0.0
        %305 = vmatprep.subr.mxu0 0.0
        %306 = vmatpush1.msra.mxu0 0.0
        %307 = vmatprep.subr.mxu0 0.0
        %308 = vmatpush1.msra.mxu0 0.0
        %309 = vmatprep.subr.mxu0 0.0
        %310 = vmatpush1.msra.mxu0 0.0
        %311 = vmatprep.subr.mxu0 0.0
        %312 = vmatpush1.msra.mxu0 0.0
        %313 = vmatprep.subr.mxu0 0.0
        %314 = vmatpush1.msra.mxu0 0.0
        %315 = vmatprep.subr.mxu0 0.0
        %316 = vmatpush1.msra.mxu0 0.0
        %317 = vmatprep.subr.mxu0 0.0
        %318 = vmatpush1.msra.mxu0 0.0
        %319 = vmatprep.subr.mxu0 0.0
        %320 = vmatpush1.msra.mxu0 0.0
        %321 = vmatprep.subr.mxu0 0.0
        %322 = vmatpush1.msra.mxu0 0.0
        %323 = vmatprep.subr.mxu0 0.0
        %324 = vmatpush1.msra.mxu0 0.0
        %325 = vmatprep.subr.mxu0 0.0
        %326 = vmatpush1.msra.mxu0 0.0
        %327 = vmatprep.subr.mxu0 0.0
        %328 = vmatpush1.msra.mxu0 0.0
        %329 = vmatprep.subr.mxu0 0.0
        %330 = vmatpush1.msra.mxu0 0.0
        %331 = vmatprep.subr.mxu0 0.0
        %332 = vmatpush1.msra.mxu0 0.0
        %333 = vmatprep.subr.mxu0 0.0
        %334 = vmatpush1.msra.mxu0 0.0
        %335 = vmatprep.subr.mxu0 0.0
        %336 = vmatpush1.msra.mxu0 0.0
        %337 = vmatprep.subr.mxu0 0.0
        %338 = vmatpush1.msra.mxu0 0.0
        %339 = vmatprep.mubr.f32.mxu0 0.0
        %340 = vmatmul.mubr.f32.gmra.mrb[0].mxu0 %v260
        %v341 = vpop.f32.mrb[0].mxu0
        %v342 = vadd.f32 0.0, %v341
        %v343 = vpop.f32.mrb[0].mxu0
        %344 = vmatprep.mubr.f32.mxu0 0.0
        %345 = vmatmul.mubr.f32.gmra.mrb[0].mxu0 %v263
        %v346 = vpop.f32.mrb[0].mxu0
        %v347 = vadd.f32 0.0, %v346
        %v348 = vpop.f32.mrb[0].mxu0
        %349 = vmatprep.mubr.f32.mxu0 0.0
        %350 = vmatmul.mubr.f32.gmra.mrb[0].mxu0 %v266
        %v351 = vpop.f32.mrb[0].mxu0
        %v352 = vadd.f32 0.0, %v351
        %v353 = vpop.f32.mrb[0].mxu0
        %354 = vmatprep.mubr.f32.mxu0 0.0
        %355 = vmatmul.mubr.f32.gmra.mrb[0].mxu0 %v269
        %v356 = vpop.f32.mrb[0].mxu0
        %v357 = vadd.f32 0.0, %v356
        %v358 = vpop.f32.mrb[0].mxu0
        %359 = vdwg.mxu0
        %v360 = vmax.f32 %v342, 0.0
        %v361 = vmax.f32 %v347, 0.0
        %v362 = vmax.f32 %v352, 0.0
        %v363 = vmax.f32 %v357, 0.0
        %364 = vst [vmem:[%s174] sm:$0xff] %v360
        %365 = vst [vmem:[%s174 + $0x8] sm:$0xff] %v361
        %366 = vst [vmem:[%s174 + $0x10] sm:$0xff] %v362
        %367 = vst [vmem:[%s174 + $0x18] sm:$0xff] %v363
        %s368 = sand.u32 %s75, 1
        %s369 = scalar_lea.sflag [#allocation5], %s368
        %s370 = sand.u32 %s75, 1
        %s371 = smul.addr %s370, 32
        %s372 = scalar_lea.vmem [#allocation8], %s371
        // Predicated region
        $region37: #{tpu_custom_call.1} parent=27 // pred_check
          %p373 = pneg %p85
        $region38: #{tpu_custom_call.1} parent=27 // pred_check_branch
          %375 = sbr.rel (%p373) target = $region40
        $region39: #{tpu_custom_call.1} parent=27 // pred_region
          %s377 = ssub.s32 512, 512
          %378 = vsyncadd %s369, %s377
          %s379 = smul.addr %s20, 4
          %s380 = smul.addr %s379, 128
          %s381 = scalar_lea.hbm %s2, %s380
          %s382 = sshll.u32 %s372, 4
          %s383 = int_to_ptr.vmem [resolvable:$true] %s382
          %388 = dma.vmem_to_hbm [thread:$0]  %s383, 512, %s381, %s369, 128, 128, 8
        $region40: #{tpu_custom_call.1} parent=27 // pred_fallthru
          _
      $region28: #{tpu_custom_call.1} parent=5 // pred_fallthru
        _
      %p389 = scmp.le.s32.totalorder 2, %s15
      // Predicated region
      $region41: #{tpu_custom_call.1} parent=5 // pred_check
        %p390 = pneg %p389
      $region42: #{tpu_custom_call.1} parent=5 // pred_check_branch
        %392 = sbr.rel (%p390) target = $region44
      $region43: #{tpu_custom_call.1} parent=5 // pred_region
        %s393 = ssub.s32 %s15, 2
        // Predicated region
        $region45: #{tpu_custom_call.1} parent=43 // pred_check
          %p394 = pneg %p91
        $region46: #{tpu_custom_call.1} parent=43 // pred_check_branch
          %396 = sbr.rel (%p394) target = $region48
        $region47: #{tpu_custom_call.1} parent=43 // pred_region
          %s397 = sand.u32 %s76, 1
          %s398 = scalar_lea.sflag [#allocation5], %s397
          %s399 = sand.u32 %s76, 1
          %s400 = smul.addr %s399, 32
          %s401 = scalar_lea.vmem [#allocation8], %s400
          %402 = dma.done %s398, 512
        $region48: #{tpu_custom_call.1} parent=43 // pred_fallthru
          _
      $region44: #{tpu_custom_call.1} parent=5 // pred_fallthru
        _
    $region6: #{tpu_custom_call.1} parent=1 // loop_footer
      %s19 = sadd.s32 1, %s15
    $region7: #{tpu_custom_call.1} parent=1 // loop_footer_branch
      %14 = sbr.rel target = $region3
    $region8: #{tpu_custom_call.1} parent=1 // loop_exit
      _
    %403 = vsyncpa [#allocation4], 1
    %s404 = scalar_lea.sflag [#allocation4], 1
    %405 = vsyncpa %s404, 1
    %406 = vsyncpa [#allocation7], 1
    %407 = vsyncpa [#allocation5], 1
    %s408 = scalar_lea.sflag [#allocation5], 1
    %409 = vsyncpa %s408, 1

</llo_original>
